<compile_context>
chip_gen: v6e
topology: v6e:2x2x1
jax: 0.10.0
libtpu: 0.0.40
codegen_flags: <defaults>
</compile_context>

<pallas_src>
import functools

import jax
import jax.numpy as jnp
from jax import lax
from jax.experimental import pallas as pl
from jax.experimental.pallas import tpu as pltpu


def _self_attn_kernel(x_ref, w_ref, b_ref, o_ref, *, tb, C, C8):
    """One batch-tile of SelfAttention1d.

    x_ref : (tb, C, L) f32    input activations (residual term included).
    w_ref : (Ctot, C)  bf16   fused [Wq; Wk; gamma*Wv] (Ctot = 2*C//8 + C).
    b_ref : (Ctot, 1)  f32    fused [bq; bk; gamma*bv].
    o_ref : (tb, C, L) f32    gamma*attn_out + x, written per batch element.
    """
    w = w_ref[...]                                     # (Ctot, C) bf16
    bias = b_ref[...]                                  # (Ctot, 1) f32

    # TODO(synk): for large L (esp. v7x, 64 MiB VMEM), tile the key axis with
    # an online/flash softmax (running max/sum scratch) instead of
    # materializing the (L, L) logits.
    for b in range(tb):                                # static unroll over the tile
        x = x_ref[b]                                   # (C, L) f32

        # Fused Q/K/V projection: one bf16 MXU matmul, f32 accumulation,
        # f32 bias broadcast (bias no longer rides along in bf16).
        qkv = lax.dot_general(
            w, x.astype(jnp.bfloat16),
            dimension_numbers=(((1,), (0,)), ((), ())),
            preferred_element_type=jnp.float32) + bias  # (Ctot, L) f32

        q = qkv[:C8, :].astype(jnp.bfloat16)            # (C8, L)
        k = qkv[C8:2 * C8, :].astype(jnp.bfloat16)      # (C8, L)
        v = qkv[2 * C8:, :].astype(jnp.bfloat16)        # (C,  L)

        # logits[j_key, i_query] = sum_c k[c, j] * q[c, i]  == K^T Q.
        # Keys sit on the sublane axis so the softmax stats are lane-oriented
        # (no relayout of the reciprocal vector later).
        logits = lax.dot_general(
            k, q, dimension_numbers=(((0,), (0,)), ((), ())),
            preferred_element_type=jnp.float32)         # (L_k, L_q) f32

        # softmax over keys (axis 0); statistics kept in f32 for stability.
        # NOTE(v6e/v7x): if profiling shows the single EUP (exp) is the
        # binding slot, exp could run on bf16 inputs; kept f32 here for v5e
        # compatibility and accuracy.
        m = jnp.max(logits, axis=0, keepdims=True)      # (1, L_q) f32
        p = jnp.exp(logits - m)                         # (L_k, L_q), values in (0, 1]
        denom = jnp.sum(p, axis=0, keepdims=True)       # (1, L_q) f32

        # out[c, i] = sum_j v[c, j] * p[j, i]; normalization folded into the
        # (C, L) result (C*L multiplies) instead of scaling the (L, L) matrix.
        pv = lax.dot_general(
            v, p.astype(jnp.bfloat16),
            dimension_numbers=(((1,), (0,)), ((), ())),
            preferred_element_type=jnp.float32)         # (C, L_q) f32

        # gamma already folded into Wv/bv; residual add in f32.
        # Direct per-element store: no concat buffer, bounded live ranges.
        o_ref[b] = pv * pl.reciprocal(denom, approx=True) + x


def pack_params(params):
    """One-time parameter prep: fold gamma into W_v/b_v, fuse QKV weights."""
    gamma = params["gamma"][0]
    w = jnp.concatenate(
        [params["wq"], params["wk"], gamma * params["wv"]], axis=0)  # (Ctot, C)
    b = jnp.concatenate(
        [params["bq"], params["bk"], gamma * params["bv"]], axis=0)  # (Ctot, 1)
    return {"w": w.astype(jnp.bfloat16), "b": b.astype(jnp.float32)}


def _vmem_cap_bytes():
    # Leave headroom below physical VMEM: ~48 MiB on v7x (64 MiB / TC),
    # ~96 MiB on v5e/v6e (128 MiB). Conservative fallback if the query fails.
    try:
        phys = pltpu.get_tpu_info().vmem_capacity_bytes
        return (phys * 3) // 4
    except Exception:
        return 48 << 20


def _auto_batch_tile(B, C, L):
    """Pick a batch tile: keep >= 4 grid steps for pipelining / megacore,
    grow the tile only while per-step temporaries stay small."""
    Ctot = 2 * (C // 8) + C
    per_batch = 4 * (3 * L * L + (Ctot + 3 * C) * L)   # rough f32 live bytes / element
    tb = 1
    while (B % (tb * 2) == 0) and (B // (tb * 2) >= 4) \
            and ((tb * 2) * per_batch <= (8 << 20)):
        tb *= 2
    return tb


def self_attention_1d(x, packed, *, batch_tile=None):
    """x: (B, C, L) float32.  packed: output of pack_params()."""
    B, C, L = x.shape
    C8 = C // 8
    Ctot = 2 * C8 + C
    w = packed["w"]
    bias = packed["b"]
    assert w.shape == (Ctot, C) and bias.shape == (Ctot, 1)

    tb = _auto_batch_tile(B, C, L) if batch_tile is None else batch_tile
    assert B % tb == 0
    n_tiles = B // tb

    # VMEM budget: double-buffered x/o blocks + weights/bias, plus ALL tb
    # unrolled iterations' temporaries (Python `for` does not retire buffers).
    io_bytes = 4 * tb * C * L * 4                      # x + o, 2 buffers each, f32
    w_bytes = 2 * (Ctot * C * 2 + Ctot * 4)            # bf16 weights + f32 bias, 2 buffers
    per_batch_tmp = 6 * Ctot * L + 10 * L * L + 4 * C * L
    est = io_bytes + w_bytes + tb * per_batch_tmp
    vmem_limit = int(min(max(2 * est + (4 << 20), 32 << 20), _vmem_cap_bytes()))

    kernel = functools.partial(_self_attn_kernel, tb=tb, C=C, C8=C8)
    return pl.pallas_call(
        kernel,
        out_shape=jax.ShapeDtypeStruct((B, C, L), jnp.float32),
        grid=(n_tiles,),
        in_specs=[
            # Last two dims span the full (C, L) array -> legal for any C, L.
            pl.BlockSpec((tb, C, L), lambda i: (i, 0, 0)),
            # Constant-index weight/bias blocks (tiny; single-buffering via
            # pipeline_mode=pl.Buffered(1) would be free but is not critical).
            pl.BlockSpec((Ctot, C), lambda i: (0, 0)),
            pl.BlockSpec((Ctot, 1), lambda i: (0, 0)),
        ],
        out_specs=pl.BlockSpec((tb, C, L), lambda i: (i, 0, 0)),
        compiler_params=pltpu.CompilerParams(
            dimension_semantics=("parallel",),
            vmem_limit_bytes=vmem_limit),
    )(x, w, bias)


def _spectral_normalize(w):
    # divide by largest singular value (fixed point of torch's power iteration)
    sigma = jnp.linalg.svd(w, compute_uv=False)[0]
    return w / sigma


def make_params(key, C):
    C8 = C // 8
    ks = jax.random.split(key, 6)
    scale = 1.0 / jnp.sqrt(C)
    wq = jax.random.uniform(ks[0], (C8, C), jnp.float32, -scale, scale)
    wk = jax.random.uniform(ks[1], (C8, C), jnp.float32, -scale, scale)
    wv = jax.random.uniform(ks[2], (C, C), jnp.float32, -scale, scale)
    bq = jax.random.uniform(ks[3], (C8, 1), jnp.float32, -scale, scale)
    bk = jax.random.uniform(ks[4], (C8, 1), jnp.float32, -scale, scale)
    bv = jax.random.uniform(ks[5], (C, 1), jnp.float32, -scale, scale)
    # nn.Parameter(torch.zeros(1)) -> gamma shape (1,); set nonzero here so the
    # attention path is actually exercised (synthetic weights, not a checkpoint).
    gamma = jnp.array([0.5], dtype=jnp.float32)
    return {
        "wq": _spectral_normalize(wq), "bq": bq,
        "wk": _spectral_normalize(wk), "bk": bk,
        "wv": _spectral_normalize(wv), "bv": bv,
        "gamma": gamma,
    }


def reference(x, p):
    # pure-JAX f32 reference of the PyTorch forward
    q = jnp.einsum("oc,bcl->bol", p["wq"], x) + p["bq"][None]
    k = jnp.einsum("oc,bcl->bol", p["wk"], x) + p["bk"][None]
    v = jnp.einsum("oc,bcl->bol", p["wv"], x) + p["bv"][None]
    attn = jax.nn.softmax(jnp.einsum("bol,bom->blm", q, k), axis=-1)
    out = jnp.einsum("bcl,bml->bcm", v, attn)
    return p["gamma"][0] * out + x


if __name__ == "__main__":
    key = jax.random.PRNGKey(0)
    kx, kp = jax.random.split(key)
    B, C, L = 2, 32, 16                      # C // 8 == 4
    x = jax.random.normal(kx, (B, C, L), dtype=jnp.float32)
    params = make_params(kp, C)
    packed = pack_params(params)

    out = self_attention_1d(x, packed)
    out = jax.block_until_ready(out)

    ref = reference(x, params)
    assert out.shape == (B, C, L)
    # bf16 MXU operands + approx reciprocal -> loosened tolerance vs f32 ref.
    err = float(jnp.max(jnp.abs(out - ref)))
    assert jnp.allclose(out, ref, atol=5e-2, rtol=5e-2), f"mismatch, max err={err}"
    print("KERNEL_OK")
</pallas_src>

<mosaic_0001>
module attributes {stable_mosaic.version = 11 : i64} {
  func.func @_self_attn_kernel(%arg0: i32, %arg1: memref<1x32x16xf32, #tpu.memory_space<vmem>>, %arg2: memref<40x32xbf16, #tpu.memory_space<vmem>>, %arg3: memref<40x1xf32, #tpu.memory_space<vmem>>, %arg4: memref<1x32x16xf32, #tpu.memory_space<vmem>>) attributes {dimension_semantics = [#tpu.dimension_semantics<parallel>], iteration_bounds = array<i64: 2>, scalar_prefetch = 0 : i64, scratch_operands = 0 : i64, tpu.core_type = #tpu.core_type<tc>, window_params = [{transform_indices = @transform_0, window_bounds = array<i64: 1, 32, 16>}, {pipeline_mode = #tpu.pipeline_mode<synchronous>, transform_indices = @transform_1, window_bounds = array<i64: 40, 32>}, {pipeline_mode = #tpu.pipeline_mode<synchronous>, transform_indices = @transform_2, window_bounds = array<i64: 40, 1>}, {transform_indices = @transform_3, window_bounds = array<i64: 1, 32, 16>}]} {
    %c0 = arith.constant 0 : index
    %c0_0 = arith.constant 0 : index
    %0 = vector.load %arg2[%c0, %c0_0] : memref<40x32xbf16, #tpu.memory_space<vmem>>, vector<40x32xbf16>
    %c0_1 = arith.constant 0 : index
    %c0_2 = arith.constant 0 : index
    %1 = vector.load %arg3[%c0_1, %c0_2] : memref<40x1xf32, #tpu.memory_space<vmem>>, vector<40x1xf32>
    %c0_3 = arith.constant 0 : index
    %c0_4 = arith.constant 0 : index
    %c0_5 = arith.constant 0 : index
    %2 = vector.load %arg1[%c0_3, %c0_4, %c0_5] : memref<1x32x16xf32, #tpu.memory_space<vmem>>, vector<1x32x16xf32>
    %3 = vector.shape_cast %2 : vector<1x32x16xf32> to vector<32x16xf32>
    %4 = arith.truncf %3 : vector<32x16xf32> to vector<32x16xbf16>
    %cst = arith.constant dense<0.000000e+00> : vector<40x16xf32>
    %5 = tpu.matmul %0, %4, %cst {dimension_numbers = #tpu.dot_dimension_numbers<[1], [0], [0], [1], [0, 0, 1, 1], [], []>} : vector<40x32xbf16>, vector<32x16xbf16>, vector<40x16xf32> -> vector<40x16xf32>
    %6 = vector.broadcast %1 : vector<40x1xf32> to vector<40x16xf32>
    %7 = arith.addf %5, %6 : vector<40x16xf32>
    %8 = vector.extract_strided_slice %7 {offsets = [0, 0], sizes = [4, 16], strides = [1, 1]} : vector<40x16xf32> to vector<4x16xf32>
    %9 = arith.truncf %8 : vector<4x16xf32> to vector<4x16xbf16>
    %10 = vector.extract_strided_slice %7 {offsets = [4, 0], sizes = [4, 16], strides = [1, 1]} : vector<40x16xf32> to vector<4x16xf32>
    %11 = arith.truncf %10 : vector<4x16xf32> to vector<4x16xbf16>
    %12 = vector.extract_strided_slice %7 {offsets = [8, 0], sizes = [32, 16], strides = [1, 1]} : vector<40x16xf32> to vector<32x16xf32>
    %13 = arith.truncf %12 : vector<32x16xf32> to vector<32x16xbf16>
    %cst_6 = arith.constant dense<0.000000e+00> : vector<16x16xf32>
    %14 = tpu.matmul %11, %9, %cst_6 {dimension_numbers = #tpu.dot_dimension_numbers<[0], [0], [1], [1], [0, 1, 1, 1], [], []>} : vector<4x16xbf16>, vector<4x16xbf16>, vector<16x16xf32> -> vector<16x16xf32>
    %cst_7 = arith.constant dense<0xFF800000> : vector<16xf32>
    %15 = vector.multi_reduction <maximumf>, %14, %cst_7 [0] : vector<16x16xf32> to vector<16xf32>
    %16 = vector.shape_cast %15 : vector<16xf32> to vector<1x16xf32>
    %17 = vector.broadcast %16 : vector<1x16xf32> to vector<16x16xf32>
    %18 = arith.subf %14, %17 : vector<16x16xf32>
    %19 = math.exp %18 : vector<16x16xf32>
    %cst_8 = arith.constant dense<0.000000e+00> : vector<16xf32>
    %20 = vector.multi_reduction <add>, %19, %cst_8 [0] : vector<16x16xf32> to vector<16xf32>
    %21 = vector.shape_cast %20 : vector<16xf32> to vector<1x16xf32>
    %22 = arith.truncf %19 : vector<16x16xf32> to vector<16x16xbf16>
    %cst_9 = arith.constant dense<0.000000e+00> : vector<32x16xf32>
    %23 = tpu.matmul %13, %22, %cst_9 {dimension_numbers = #tpu.dot_dimension_numbers<[1], [0], [0], [1], [0, 0, 1, 1], [], []>} : vector<32x16xbf16>, vector<16x16xbf16>, vector<32x16xf32> -> vector<32x16xf32>
    %24 = tpu.reciprocal %21 {approx = true} : vector<1x16xf32> -> vector<1x16xf32>
    %25 = vector.broadcast %24 : vector<1x16xf32> to vector<32x16xf32>
    %26 = arith.mulf %23, %25 : vector<32x16xf32>
    %27 = arith.addf %26, %3 : vector<32x16xf32>
    %c0_10 = arith.constant 0 : index
    %c0_11 = arith.constant 0 : index
    %c0_12 = arith.constant 0 : index
    %28 = vector.load %arg4[%c0_10, %c0_11, %c0_12] : memref<1x32x16xf32, #tpu.memory_space<vmem>>, vector<1x32x16xf32>
    %29 = vector.shape_cast %28 : vector<1x32x16xf32> to vector<32x16xf32>
    %30 = vector.shape_cast %27 : vector<32x16xf32> to vector<1x32x16xf32>
    tpu.vector_store %arg4[%c0_10, %c0_11, %c0_12], %30 {strides = array<i32>} : memref<1x32x16xf32, #tpu.memory_space<vmem>>, vector<1x32x16xf32>,
    return
  }
  func.func @transform_0(%arg0: i32) -> (i32, i32, i32) {
    %c0_i32 = arith.constant 0 : i32
    %c0_i32_0 = arith.constant 0 : i32
    %c0_i32_1 = arith.constant 0 : i32
    return %arg0, %c0_i32, %c0_i32_0 : i32, i32, i32
  }
  func.func @transform_1(%arg0: i32) -> (i32, i32) {
    %c0_i32 = arith.constant 0 : i32
    %c0_i32_0 = arith.constant 0 : i32
    %c0_i32_1 = arith.constant 0 : i32
    return %c0_i32, %c0_i32_0 : i32, i32
  }
  func.func @transform_2(%arg0: i32) -> (i32, i32) {
    %c0_i32 = arith.constant 0 : i32
    %c0_i32_0 = arith.constant 0 : i32
    %c0_i32_1 = arith.constant 0 : i32
    return %c0_i32, %c0_i32_0 : i32, i32
  }
  func.func @transform_3(%arg0: i32) -> (i32, i32, i32) {
    %c0_i32 = arith.constant 0 : i32
    %c0_i32_0 = arith.constant 0 : i32
    %c0_i32_1 = arith.constant 0 : i32
    return %arg0, %c0_i32, %c0_i32_0 : i32, i32, i32
  }
}

</mosaic_0001>

<llo_original>
// kernel: tpu_custom_call.1
$region0: #{tpu_custom_call.1}
  #allocation0 [shape = 'u32[]', space=smem, size = 0x4, offset = 0x4, fixed_abs, tag = 'smem constant byte address 0x4 - core index']
  #allocation1 [shape = 'u32[144,128]{1,0:T(1,128)}', space=vmem, size = 0x12000, scoped, tag = 'internal scratch']
  %s0 = inlined_call_operand.vmem [shape: f32[2,32,16], index: 0, kind: input, shape index: {}]
  %s1 = inlined_call_operand.vmem [shape: bf16[40,32], index: 1, kind: input, shape index: {}]
  %s2 = inlined_call_operand.vmem [shape: f32[40,1], index: 2, kind: input, shape index: {}]
  %s3 = inlined_call_operand.vmem [shape: f32[2,32,16], index: 3, kind: output, shape index: {}]
  %s4 = sld [smem:[#allocation0]]
  $region45: #{tpu_custom_call.1} parent=0
    _
  %s6 = ssub.s32 1, %s4
  %s7 = scalar_select 0, %s6, %s4
  loop: start=0, step=1, limit=4
  $region2: #{tpu_custom_call.1} parent=0 // loop_pre_header
    _
  $region3: #{tpu_custom_call.1} parent=0 // loop_header
    %s9 = sphi 0, %s13
    %p10 = scmp.ge.s32.totalorder %s9, 4
    %s19 = sphi 0, %s21
    %s22 = sphi 0, %s19
    %s23 = sphi 0, %s22
    %s39 = sphi 0, %s23
    %s43 = sphi 0, %s43
    %s45 = sphi 0, %s43
    %s46 = sphi 0, %s45
    %s60 = sphi 0, %s46
    %s64 = sphi 0, %s64
    %s66 = sphi 0, %s64
    %s67 = sphi 0, %s66
    %s81 = sphi 0, %s67
    %s87 = sphi 0, %s89
    %s90 = sphi 0, %s87
    %s91 = sphi 0, %s90
    %s107 = sphi 0, %s91
  $region4: #{tpu_custom_call.1} parent=0 // loop_header_branch
    %12 = sbr.rel (%p10) target = $region8
  $region5: #{tpu_custom_call.1} parent=0 // loop_body
    %s14 = ssub.s32 %s9, 1
    %s15 = ssub.s32 %s9, 2
    %s16 = sadd.s32 %s9, 1
    %s17 = ssub.s32 %s9, %s16
    %p18 = scmp.eq.s32.totalorder %s17, 0
    %s20 = sadd.s32 %s19, 1
    %s21 = scalar_select %p18, %s19, %s20
    %p24 = pneg %p18
    %p25 = scmp.eq.s32.totalorder %s9, 1
    %p26 = por %p24, %p25
    %p27 = scmp.ne.s32.totalorder %s19, %s22
    %p28 = scmp.eq.s32.totalorder %s9, 0
    %p29 = por %p27, %p28
    %p30 = scmp.ne.s32.totalorder %s19, %s22
    %p31 = scmp.eq.s32.totalorder %s14, 1
    %p32 = por %p30, %p31
    %p33 = scmp.ne.s32.totalorder %s22, %s23
    %p34 = scmp.eq.s32.totalorder %s14, 0
    %p35 = por %p33, %p34
    %p36 = scmp.ne.s32.totalorder %s22, %s23
    %p37 = scmp.eq.s32.totalorder %s15, 1
    %p38 = por %p36, %p37
    %p40 = scmp.ne.s32.totalorder %s23, %s39
    %p41 = scmp.eq.s32.totalorder %s15, 0
    %p42 = por %p40, %p41
    %s44 = sadd.s32 %s43, 1
    %p47 = scmp.eq.s32.totalorder %s9, 1
    %p48 = scmp.ne.s32.totalorder %s43, %s45
    %p49 = scmp.eq.s32.totalorder %s9, 0
    %p50 = por %p48, %p49
    %p51 = scmp.ne.s32.totalorder %s43, %s45
    %p52 = scmp.eq.s32.totalorder %s14, 1
    %p53 = por %p51, %p52
    %p54 = scmp.ne.s32.totalorder %s45, %s46
    %p55 = scmp.eq.s32.totalorder %s14, 0
    %p56 = por %p54, %p55
    %p57 = scmp.ne.s32.totalorder %s45, %s46
    %p58 = scmp.eq.s32.totalorder %s15, 1
    %p59 = por %p57, %p58
    %p61 = scmp.ne.s32.totalorder %s46, %s60
    %p62 = scmp.eq.s32.totalorder %s15, 0
    %p63 = por %p61, %p62
    %s65 = sadd.s32 %s64, 1
    %p68 = scmp.eq.s32.totalorder %s9, 1
    %p69 = scmp.ne.s32.totalorder %s64, %s66
    %p70 = scmp.eq.s32.totalorder %s9, 0
    %p71 = por %p69, %p70
    %p72 = scmp.ne.s32.totalorder %s64, %s66
    %p73 = scmp.eq.s32.totalorder %s14, 1
    %p74 = por %p72, %p73
    %p75 = scmp.ne.s32.totalorder %s66, %s67
    %p76 = scmp.eq.s32.totalorder %s14, 0
    %p77 = por %p75, %p76
    %p78 = scmp.ne.s32.totalorder %s66, %s67
    %p79 = scmp.eq.s32.totalorder %s15, 1
    %p80 = por %p78, %p79
    %p82 = scmp.ne.s32.totalorder %s67, %s81
    %p83 = scmp.eq.s32.totalorder %s15, 0
    %p84 = por %p82, %p83
    %s85 = ssub.s32 %s9, %s16
    %p86 = scmp.eq.s32.totalorder %s85, 0
    %s88 = sadd.s32 %s87, 1
    %s89 = scalar_select %p86, %s87, %s88
    %p92 = pneg %p86
    %p93 = scmp.eq.s32.totalorder %s9, 1
    %p94 = por %p92, %p93
    %p95 = scmp.ne.s32.totalorder %s87, %s90
    %p96 = scmp.eq.s32.totalorder %s9, 0
    %p97 = por %p95, %p96
    %p98 = scmp.ne.s32.totalorder %s87, %s90
    %p99 = scmp.eq.s32.totalorder %s14, 1
    %p100 = por %p98, %p99
    %p101 = scmp.ne.s32.totalorder %s90, %s91
    %p102 = scmp.eq.s32.totalorder %s14, 0
    %p103 = por %p101, %p102
    %p104 = scmp.ne.s32.totalorder %s90, %s91
    %p105 = scmp.eq.s32.totalorder %s15, 1
    %p106 = por %p104, %p105
    %p108 = scmp.ne.s32.totalorder %s91, %s107
    %p109 = scmp.eq.s32.totalorder %s15, 0
    %p110 = por %p108, %p109
    %p111 = scmp.le.s32.totalorder 1, %s9
    %p112 = scmp.lt.s32.totalorder %s9, 3
    %p113 = pnand %p111, %p112
    %p114 = pneg %p113
    // Predicated region
    $region9: #{tpu_custom_call.1} parent=5 // pred_check
      _
    $region10: #{tpu_custom_call.1} parent=5 // pred_check_branch
      %116 = sbr.rel (%p113) target = $region12
    $region11: #{tpu_custom_call.1} parent=5 // pred_region
      %s117 = ssub.s32 %s9, 1
      // Predicated region
      $region13: #{tpu_custom_call.1} parent=11 // pred_check
        %p118 = pneg %p56
      $region14: #{tpu_custom_call.1} parent=11 // pred_check_branch
        %120 = sbr.rel (%p118) target = $region16
      $region15: #{tpu_custom_call.1} parent=11 // pred_region
        _
      $region16: #{tpu_custom_call.1} parent=11 // pred_fallthru
        _
      // Predicated region
      $region17: #{tpu_custom_call.1} parent=11 // pred_check
        %p121 = pneg %p77
      $region18: #{tpu_custom_call.1} parent=11 // pred_check_branch
        %123 = sbr.rel (%p121) target = $region20
      $region19: #{tpu_custom_call.1} parent=11 // pred_region
        _
      $region20: #{tpu_custom_call.1} parent=11 // pred_fallthru
        _
    $region12: #{tpu_custom_call.1} parent=5 // pred_fallthru
      _
    %p124 = scmp.lt.s32.totalorder %s9, 2
    // Predicated region
    $region21: #{tpu_custom_call.1} parent=5 // pred_check
      %p125 = pneg %p124
    $region22: #{tpu_custom_call.1} parent=5 // pred_check_branch
      %127 = sbr.rel (%p125) target = $region24
    $region23: #{tpu_custom_call.1} parent=5 // pred_region
      // Predicated region
      $region25: #{tpu_custom_call.1} parent=23 // pred_check
        %p128 = pneg %p29
      $region26: #{tpu_custom_call.1} parent=23 // pred_check_branch
        %130 = sbr.rel (%p128) target = $region28
      $region27: #{tpu_custom_call.1} parent=23 // pred_region
        %p131 = scmp.lt.s32.totalorder %s9, 1
        %s132 = scalar_select %p131, %s9, 1
        %s133 = smul.addr %s132, 4
        %s134 = smul.addr %s133, 8
        %s135 = scalar_lea.vmem %s0, %s134
      $region28: #{tpu_custom_call.1} parent=23 // pred_fallthru
        _
    $region24: #{tpu_custom_call.1} parent=5 // pred_fallthru
      _
    %p136 = scmp.le.s32.totalorder 1, %s9
    %p137 = scmp.lt.s32.totalorder %s9, 3
    %p138 = pnand %p136, %p137
    %p139 = pneg %p138
    // Predicated region
    $region29: #{tpu_custom_call.1} parent=5 // pred_check
      _
    $region30: #{tpu_custom_call.1} parent=5 // pred_check_branch
      %141 = sbr.rel (%p138) target = $region32
    $region31: #{tpu_custom_call.1} parent=5 // pred_region
      %s142 = ssub.s32 %s9, 1
      %p143 = scmp.lt.s32.totalorder %s14, 1
      %s144 = scalar_select %p143, %s14, 1
      %s145 = smul.addr %s144, 4
      %s146 = smul.addr %s145, 8
      %s147 = scalar_lea.vmem %s0, %s146
      %p148 = pneg %p35
      %p149 = pneg %p32
      %p150 = pneg %p56
      %p151 = pneg %p53
      %p152 = pneg %p77
      %p153 = pneg %p74
      %p154 = pneg %p103
      %p155 = pneg %p100
      %p156 = scmp.lt.s32.totalorder %s14, 1
      %s157 = scalar_select %p156, %s14, 1
      %s158 = smul.addr %s157, 4
      %s159 = smul.addr %s158, 8
      %s160 = scalar_lea.vmem %s3, %s159
      %p161 = scmp.lt.s32.totalorder %s14, 1
      %s162 = scalar_select %p161, %s14, 1
      %s163 = smul.addr %s162, 4
      %s164 = smul.addr %s163, 8
      %s165 = scalar_lea.vmem %s0, %s164
      %p166 = scmp.lt.s32.totalorder %s14, 1
      %s167 = scalar_select %p166, %s14, 1
      %s168 = smul.addr %s167, 4
      %s169 = smul.addr %s168, 8
      %s170 = scalar_lea.vmem %s3, %s169
      %v172 = vld [vmem:[%s1] sm:$0xf]
      %v173 = vld [vmem:[%s1 + $0x4] sm:$0xf]
      %v174 = vld [vmem:[%s1 + $0x8] sm:$0xf]
      %v175 = vld [vmem:[%s1 + $0xc] sm:$0xf]
      %v176 = vld [vmem:[%s1 + $0x10] sm:$0xf]
      %v177 = vld [vmem:[%s2] sm:$0xff]
      %v178 = vld [vmem:[%s2 + $0x8] sm:$0xff]
      %v179 = vld [vmem:[%s2 + $0x10] sm:$0xff]
      %v180 = vld [vmem:[%s2 + $0x18] sm:$0xff]
      %v181 = vld [vmem:[%s2 + $0x20] sm:$0xff]
      %v182 = vld [vmem:[%s165] sm:$0xff]
      %v183 = vld [vmem:[%s165 + $0x8] sm:$0xff]
      %v184 = vld [vmem:[%s165 + $0x10] sm:$0xff]
      %v185 = vld [vmem:[%s165 + $0x18] sm:$0xff]
      %v186 = vpack.c.bf16 %v183, %v182
      %v187 = vpack.c.bf16 %v185, %v184
      %189 = vset.pattern.permute.xlu0 0
      %190 = vperm.xlu0 %189, %v177
      %v191 = vpop.permute.xlu0 %190
      %194 = vset.pattern.permute.xlu0 0
      %195 = vperm.xlu0 %194, %v178
      %v196 = vpop.permute.xlu0 %195
      %199 = vset.pattern.permute.xlu0 0
      %200 = vperm.xlu0 %199, %v179
      %v201 = vpop.permute.xlu0 %200
      %204 = vset.pattern.permute.xlu0 0
      %205 = vperm.xlu0 %204, %v180
      %v206 = vpop.permute.xlu0 %205
      %209 = vset.pattern.permute.xlu0 0
      %210 = vperm.xlu0 %209, %v181
      %v211 = vpop.permute.xlu0 %210
      %v218 = vunpack.c.l.b16 %v172
      %v219 = vunpack.c.l.b16 %v173
      %v220 = vunpack.c.l.b16 %v174
      %v221 = vunpack.c.l.b16 %v175
      %v222 = vunpack.c.l.b16 %v176
      %v223 = vpack.c.b16 %v219, %v218
      %v224 = vpack.c.b16 %v221, %v220
      %v225 = vpack.c.b16 %v222, %v222
      %vm226 = vcmask 261120
      %v228 = vsel %vm226, %v223, 0
      %v231 = vsel %vm226, %v224, 0
      %v234 = vsel %vm226, %v225, 0
      %236 = vmatprep.subr.bf16.mxu0 0
      %237 = vmatpush1.bf16.msra.mxu0 0
      %238 = vmatprep.subr.bf16.mxu0 0
      %239 = vmatpush1.bf16.msra.mxu0 0
      %240 = vmatprep.subr.bf16.mxu0 0
      %241 = vmatpush1.bf16.msra.mxu0 0
      %242 = vmatprep.subr.bf16.mxu0 0
      %243 = vmatpush1.bf16.msra.mxu0 0
      %244 = vmatprep.subr.bf16.mxu0 0
      %245 = vmatpush1.bf16.msra.mxu0 0
      %246 = vmatprep.subr.bf16.mxu0 0
      %247 = vmatpush1.bf16.msra.mxu0 0
      %248 = vmatprep.subr.bf16.mxu0 0
      %249 = vmatpush1.bf16.msra.mxu0 %v187
      %250 = vmatprep.subr.bf16.mxu0 0
      %251 = vmatpush1.bf16.msra.mxu0 %v186
      %252 = vmatprep.subr.bf16.mxu0 0
      %253 = vmatpush2.bf16.msra.mxu0 0
      %254 = vmatprep.subr.bf16.mxu0 0
      %255 = vmatpush2.bf16.msra.mxu0 0
      %256 = vmatprep.subr.bf16.mxu0 0
      %257 = vmatpush2.bf16.msra.mxu0 0
      %258 = vmatprep.subr.bf16.mxu0 0
      %259 = vmatpush2.bf16.msra.mxu0 0
      %260 = vmatprep.subr.bf16.mxu0 0
      %261 = vmatpush2.bf16.msra.mxu0 0
      %262 = vmatprep.subr.bf16.mxu0 0
      %263 = vmatpush2.bf16.msra.mxu0 0
      %264 = vmatprep.subr.bf16.mxu0 0
      %265 = vmatpush2.bf16.msra.mxu0 0
      %266 = vmatprep.subr.bf16.mxu0 0
      %267 = vmatpush2.bf16.msra.mxu0 0
      %268 = vmatprep.mubr.bf16.mxu0 0
      %269 = vmatmul.mubr.bf16.gmra.mxu0 %v228
      %v270 = vpop.f32.mrf.mxu0
      %v271 = vadd.f32 %v191, %v270
      %v272 = vpop.f32.mrf.mxu0
      %v273 = vpop.f32.mrf.mxu0
      %v274 = vadd.f32 %v196, %v273
      %v275 = vpop.f32.mrf.mxu0
      %276 = vmatprep.mubr.bf16.mxu0 0
      %277 = vmatmul.mubr.bf16.gmra.mxu0 %v231
      %v278 = vpop.f32.mrf.mxu0
      %v279 = vadd.f32 %v201, %v278
      %v280 = vpop.f32.mrf.mxu0
      %v281 = vpop.f32.mrf.mxu0
      %v282 = vadd.f32 %v206, %v281
      %v283 = vpop.f32.mrf.mxu0
      %284 = vmatprep.mubr.bf16.mxu0 0
      %285 = vmatmul.mubr.bf16.gmra.mxu0 %v234
      %v286 = vpop.f32.mrf.mxu0
      %v287 = vadd.f32 %v211, %v286
      %v288 = vpop.f32.mrf.mxu0
      %v289 = vpop.f32.mrf.mxu0
      %v290 = vpop.f32.mrf.mxu0
      %291 = vdwg.mxu0
      %v292 = vpack.c.bf16 %v271, %v271
      %v293 = vpack.c.bf16 %v279, %v274
      %v294 = vpack.c.bf16 %v287, %v282
      %v296 = vrot.slane %v292, 2
      %298 = vxpose.xlu0.c.b16.start [1/8] %v296, 128
      %299 = vxpose.xlu0.c.b16.cont [2/8] 0, 128
      %300 = vxpose.xlu0.c.b16.cont [3/8] 0, 128
      %301 = vxpose.xlu0.c.b16.cont [4/8] 0, 128
      %302 = vxpose.xlu0.c.b16.cont [5/8] 0, 128
      %303 = vxpose.xlu0.c.b16.cont [6/8] 0, 128
      %304 = vxpose.xlu0.c.b16.cont [7/8] 0, 128
      %305 = vxpose.xlu0.c.b16.end [8/8] 0, 128
      %v306 = vpop.trf.xlu0
      %v307 = vpop.trf.xlu0
      %v308 = vpop.trf.xlu0
      %v309 = vpop.trf.xlu0
      %v310 = vpop.trf.xlu0
      %v311 = vpop.trf.xlu0
      %v312 = vpop.trf.xlu0
      %v313 = vpop.trf.xlu0
      %vm314 = vcmask 31744
      %v316 = vsel %vm314, %v306, 0
      %vm318 = vcmask 1041408
      %v320 = vsel %vm318, %v292, 0
      %322 = vmatprep.subr.bf16.mxu0 0
      %323 = vmatpush1.bf16.msra.mxu0 0
      %324 = vmatprep.subr.bf16.mxu0 0
      %325 = vmatpush1.bf16.msra.mxu0 0
      %326 = vmatprep.subr.bf16.mxu0 0
      %327 = vmatpush1.bf16.msra.mxu0 0
      %328 = vmatprep.subr.bf16.mxu0 0
      %329 = vmatpush1.bf16.msra.mxu0 0
      %330 = vmatprep.subr.bf16.mxu0 0
      %331 = vmatpush1.bf16.msra.mxu0 0
      %332 = vmatprep.subr.bf16.mxu0 0
      %333 = vmatpush1.bf16.msra.mxu0 0
      %334 = vmatprep.subr.bf16.mxu0 0
      %335 = vmatpush1.bf16.msra.mxu0 0
      %336 = vmatprep.subr.bf16.mxu0 0
      %337 = vmatpush1.bf16.msra.mxu0 %v320
      %338 = vmatprep.subr.bf16.mxu0 0
      %339 = vmatpush2.bf16.msra.mxu0 0
      %340 = vmatprep.subr.bf16.mxu0 0
      %341 = vmatpush2.bf16.msra.mxu0 0
      %342 = vmatprep.subr.bf16.mxu0 0
      %343 = vmatpush2.bf16.msra.mxu0 0
      %344 = vmatprep.subr.bf16.mxu0 0
      %345 = vmatpush2.bf16.msra.mxu0 0
      %346 = vmatprep.subr.bf16.mxu0 0
      %347 = vmatpush2.bf16.msra.mxu0 0
      %348 = vmatprep.subr.bf16.mxu0 0
      %349 = vmatpush2.bf16.msra.mxu0 0
      %350 = vmatprep.subr.bf16.mxu0 0
      %351 = vmatpush2.bf16.msra.mxu0 0
      %352 = vmatprep.subr.bf16.mxu0 0
      %353 = vmatpush2.bf16.msra.mxu0 0
      %354 = vmatprep.mubr.bf16.mxu0 0
      %355 = vmatmul.mubr.bf16.gmra.mxu0 %v316
      %v356 = vpop.f32.mrf.mxu0
      %v357 = vadd.f32 0.0, %v356
      %v358 = vpop.f32.mrf.mxu0
      %v359 = vpop.f32.mrf.mxu0
      %v360 = vadd.f32 0.0, %v359
      %v361 = vpop.f32.mrf.mxu0
      %362 = vdwg.mxu0
      %vm363 = vcmask 130048
      %v364 = vsel %vm363, %v357, -inf
      %v365 = vsel %vm363, %v360, -inf
      %v366 = vmax.f32 %v364, %v365
      %v367 = vrot.slane %v366, 4
      %v368 = vmax.f32 %v366, %v367
      %v369 = vrot.slane %v368, 2
      %v370 = vmax.f32 %v368, %v369
      %v371 = vrot.slane %v370, 1
      %v372 = vmax.f32 %v370, %v371
      %v373 = vsub.f32 %v357, %v372
      %v374 = vsub.f32 %v360, %v372
      %v375 = vmul.f32 %v373, 1.442695
      %v376 = vpow.pop %v375
      %v377 = vmul.f32 %v374, 1.442695
      %v378 = vpow.pop %v377
      %v379 = vsel %vm363, %v376, 0.0
      %v380 = vsel %vm363, %v378, 0.0
      %v381 = vadd.f32 %v379, %v380
      %v382 = vrot.slane %v381, 4
      %v383 = vadd.f32 %v381, %v382
      %v384 = vrot.slane %v383, 2
      %v385 = vadd.f32 %v383, %v384
      %v386 = vrot.slane %v385, 1
      %v387 = vadd.f32 %v385, %v386
      %v388 = vpack.c.bf16 %v378, %v376
      %v390 = vsel %vm363, %v293, 0
      %v393 = vsel %vm363, %v294, 0
      %395 = vmatprep.subr.bf16.mxu0 0
      %396 = vmatpush1.bf16.msra.mxu0 0
      %397 = vmatprep.subr.bf16.mxu0 0
      %398 = vmatpush1.bf16.msra.mxu0 0
      %399 = vmatprep.subr.bf16.mxu0 0
      %400 = vmatpush1.bf16.msra.mxu0 0
      %401 = vmatprep.subr.bf16.mxu0 0
      %402 = vmatpush1.bf16.msra.mxu0 0
      %403 = vmatprep.subr.bf16.mxu0 0
      %404 = vmatpush1.bf16.msra.mxu0 0
      %405 = vmatprep.subr.bf16.mxu0 0
      %406 = vmatpush1.bf16.msra.mxu0 0
      %407 = vmatprep.subr.bf16.mxu0 0
      %408 = vmatpush1.bf16.msra.mxu0 0
      %409 = vmatprep.subr.bf16.mxu0 0
      %410 = vmatpush1.bf16.msra.mxu0 %v388
      %411 = vmatprep.subr.bf16.mxu0 0
      %412 = vmatpush2.bf16.msra.mxu0 0
      %413 = vmatprep.subr.bf16.mxu0 0
      %414 = vmatpush2.bf16.msra.mxu0 0
      %415 = vmatprep.subr.bf16.mxu0 0
      %416 = vmatpush2.bf16.msra.mxu0 0
      %417 = vmatprep.subr.bf16.mxu0 0
      %418 = vmatpush2.bf16.msra.mxu0 0
      %419 = vmatprep.subr.bf16.mxu0 0
      %420 = vmatpush2.bf16.msra.mxu0 0
      %421 = vmatprep.subr.bf16.mxu0 0
      %422 = vmatpush2.bf16.msra.mxu0 0
      %423 = vmatprep.subr.bf16.mxu0 0
      %424 = vmatpush2.bf16.msra.mxu0 0
      %425 = vmatprep.subr.bf16.mxu0 0
      %426 = vmatpush2.bf16.msra.mxu0 0
      %427 = vmatprep.mubr.bf16.mxu0 0
      %428 = vmatmul.mubr.bf16.gmra.mxu0 %v390
      %v429 = vpop.f32.mrf.mxu0
      %v430 = vadd.f32 0.0, %v429
      %v431 = vpop.f32.mrf.mxu0
      %v432 = vpop.f32.mrf.mxu0
      %v433 = vadd.f32 0.0, %v432
      %v434 = vpop.f32.mrf.mxu0
      %435 = vmatprep.mubr.bf16.mxu0 0
      %436 = vmatmul.mubr.bf16.gmra.mxu0 %v393
      %v437 = vpop.f32.mrf.mxu0
      %v438 = vadd.f32 0.0, %v437
      %v439 = vpop.f32.mrf.mxu0
      %v440 = vpop.f32.mrf.mxu0
      %v441 = vadd.f32 0.0, %v440
      %v442 = vpop.f32.mrf.mxu0
      %443 = vdwg.mxu0
      %v444 = vrcp.pop %v387
      %v445 = vmul.f32 %v430, %v444
      %v446 = vmul.f32 %v433, %v444
      %v447 = vmul.f32 %v438, %v444
      %v448 = vmul.f32 %v441, %v444
      %v449 = vadd.f32 %v445, %v182
      %v450 = vadd.f32 %v446, %v183
      %v451 = vadd.f32 %v447, %v184
      %v452 = vadd.f32 %v448, %v185
      %453 = vst.msk [vmem:[%s170] sm:$0xff] %vm363, %v449
      %454 = vst.msk [vmem:[%s170 + $0x8] sm:$0xff] %vm363, %v450
      %455 = vst.msk [vmem:[%s170 + $0x10] sm:$0xff] %vm363, %v451
      %456 = vst.msk [vmem:[%s170 + $0x18] sm:$0xff] %vm363, %v452
      %p457 = scmp.lt.s32.totalorder %s14, 1
      %s458 = scalar_select %p457, %s14, 1
      %s459 = smul.addr %s458, 4
      %s460 = smul.addr %s459, 8
      %s461 = scalar_lea.vmem %s3, %s460
      // Predicated region
      $region33: #{tpu_custom_call.1} parent=31 // pred_check
        %p462 = pneg %p100
      $region34: #{tpu_custom_call.1} parent=31 // pred_check_branch
        %464 = sbr.rel (%p462) target = $region36
      $region35: #{tpu_custom_call.1} parent=31 // pred_region
        _
      $region36: #{tpu_custom_call.1} parent=31 // pred_fallthru
        _
    $region32: #{tpu_custom_call.1} parent=5 // pred_fallthru
      _
    %p465 = scmp.le.s32.totalorder 2, %s9
    // Predicated region
    $region37: #{tpu_custom_call.1} parent=5 // pred_check
      %p466 = pneg %p465
    $region38: #{tpu_custom_call.1} parent=5 // pred_check_branch
      %468 = sbr.rel (%p466) target = $region40
    $region39: #{tpu_custom_call.1} parent=5 // pred_region
      %s469 = ssub.s32 %s9, 2
      // Predicated region
      $region41: #{tpu_custom_call.1} parent=39 // pred_check
        %p470 = pneg %p106
      $region42: #{tpu_custom_call.1} parent=39 // pred_check_branch
        %472 = sbr.rel (%p470) target = $region44
      $region43: #{tpu_custom_call.1} parent=39 // pred_region
        %p473 = scmp.lt.s32.totalorder %s15, 1
        %s474 = scalar_select %p473, %s15, 1
        %s475 = smul.addr %s474, 4
        %s476 = smul.addr %s475, 8
        %s477 = scalar_lea.vmem %s3, %s476
      $region44: #{tpu_custom_call.1} parent=39 // pred_fallthru
        _
    $region40: #{tpu_custom_call.1} parent=5 // pred_fallthru
      _
  $region6: #{tpu_custom_call.1} parent=0 // loop_footer
    %s13 = sadd.s32 1, %s9
  $region7: #{tpu_custom_call.1} parent=0 // loop_footer_branch
    %8 = sbr.rel target = $region3
  $region8: #{tpu_custom_call.1} parent=0 // loop_exit
    _

</llo_original>
